<compile_context>
chip_gen: v6e
topology: v6e:2x2x1
jax: 0.10.0
libtpu: 0.0.40
codegen_flags: <defaults>
</compile_context>

<pallas_src>
import jax
import jax.numpy as jnp
from jax.experimental import pallas as pl
from jax.experimental.pallas import tpu as pltpu


def _round_up(n, m):
    return ((n + m - 1) // m) * m


def _mlp_kernel(x_ref, w1_ref, b1_ref, w2_ref, b2_ref, w3r_ref, b3_ref, o_ref):
    # Layer 1: in-kernel bf16 cast of x (VPU), MXU matmul, f32 accum + bias + ReLU.
    x = x_ref[...].astype(jnp.bfloat16)
    h1 = jnp.dot(x, w1_ref[...], preferred_element_type=jnp.float32)
    h1 = jnp.maximum(h1 + b1_ref[...], 0.0)                      # (TB, H)

    # Layer 2: re-pack activations to bf16 for the MXU, f32 accum + bias + ReLU.
    h2 = jnp.dot(h1.astype(jnp.bfloat16), w2_ref[...],
                 preferred_element_type=jnp.float32)
    h2 = jnp.maximum(h2 + b2_ref[...], 0.0)                      # (TB, H)

    # Layer 3 (out_features == 1): f32 (1,H) . (TB,H)^T -> (1,TB).  The result
    # is already lane-dense (batch along lanes) so the store is unmasked.
    logits = jax.lax.dot_general(
        w3r_ref[...], h2,
        dimension_numbers=(((1,), (1,)), ((), ())),
        preferred_element_type=jnp.float32)                      # (1, TB)
    logits = logits + b3_ref[...]                                # (1,1) broadcast

    # Stable sigmoid: sigmoid(z) = 0.5 * (tanh(z/2) + 1); tanh runs on the EUP.
    o_ref[...] = (0.5 * (jnp.tanh(0.5 * logits) + 1.0)).astype(o_ref.dtype)


def discriminator_forward(x, params, *, tb=2048):
    """x: (B, input_dim) float32. params: dict of w1,b1,w2,b2,w3,b3.

    Returns (B, 1) float32 sigmoid outputs.
    """
    B, input_dim = x.shape
    hidden = params["w1"].shape[1]

    # bf16 weights for the MXU; biases / last-layer row stay f32.
    w1 = params["w1"].astype(jnp.bfloat16)
    w2 = params["w2"].astype(jnp.bfloat16)
    b1 = params["b1"].astype(jnp.float32).reshape(1, hidden)
    b2 = params["b2"].astype(jnp.float32).reshape(1, hidden)
    w3r = params["w3"].astype(jnp.float32).reshape(1, hidden)    # (H,1) -> (1,H)
    b3 = params["b3"].astype(jnp.float32).reshape(1, 1)

    # Batch tile: always a multiple of 128 (lane-dense, unmasked output stores,
    # aligned DMA).  Cap at ~half the batch when large enough so grid >= 2 and
    # the "parallel" axis can split across v7x's two TensorCores.
    tb_eff = min(_round_up(tb, 128), _round_up(B, 128))
    if B > 128:
        tb_eff = min(tb_eff, _round_up(pl.cdiv(B, 2), 128))
    grid_n = pl.cdiv(B, tb_eff)           # partial trailing x block is OK
    b_pad = grid_n * tb_eff

    # Weights/biases: full-array blocks, constant index_map -> VMEM-resident.
    def resident(a):
        return pl.BlockSpec(a.shape, lambda i: (0,) * a.ndim)

    out = pl.pallas_call(
        _mlp_kernel,
        out_shape=jax.ShapeDtypeStruct((1, b_pad), jnp.float32),
        grid=(grid_n,),
        in_specs=[
            pl.BlockSpec((tb_eff, input_dim), lambda i: (i, 0)),  # x tile (f32)
            resident(w1), resident(b1),
            resident(w2), resident(b2),
            resident(w3r), resident(b3),
        ],
        out_specs=pl.BlockSpec((1, tb_eff), lambda i: (0, i)),    # lane-dense
        compiler_params=pltpu.CompilerParams(
            dimension_semantics=("parallel",),   # megacore split on v7x
        ),
    )(x, w1, b1, w2, b2, w3r, b3)

    return out.reshape(-1, 1)[:B]


def init_params(key, state_dim, action_dim, hidden=64):
    """Kaiming-normal weights (fan_in mode), PyTorch-default uniform biases."""
    # TODO(synk): PyTorch kaiming_normal_ uses fan_out of the (out,in) weight,
    # i.e. fan_in of the math; this matches that (statistical, not bit-level).
    input_dim = state_dim + action_dim + state_dim
    k1, k2, k3, kb1, kb2, kb3 = jax.random.split(key, 6)

    def kaiming(k, fan_in, fan_out):
        std = (2.0 / fan_in) ** 0.5
        # stored (in, out) so the kernel computes x @ W
        return jax.random.normal(k, (fan_in, fan_out), jnp.float32) * std

    def bias(k, fan_in, fan_out):
        bound = 1.0 / (fan_in ** 0.5)
        return jax.random.uniform(k, (1, fan_out), jnp.float32, -bound, bound)

    return {
        "w1": kaiming(k1, input_dim, hidden), "b1": bias(kb1, input_dim, hidden),
        "w2": kaiming(k2, hidden, hidden),    "b2": bias(kb2, hidden, hidden),
        "w3": kaiming(k3, hidden, 1),         "b3": bias(kb3, hidden, 1),
    }


if __name__ == "__main__":
    state_dim, action_dim, hidden = 8, 4, 64
    input_dim = 2 * state_dim + action_dim   # state + action + next_state
    batch = 8

    key = jax.random.PRNGKey(0)
    kx, kp = jax.random.split(key)
    x = jax.random.normal(kx, (batch, input_dim), jnp.float32)
    params = init_params(kp, state_dim, action_dim, hidden)

    out = discriminator_forward(x, params)
    out = jax.block_until_ready(out)
    assert out.shape == (batch, 1)

    # Reference 1: precision-matched recipe (bf16 matmul inputs, f32 accumulation,
    # f32 final layer) — tight tolerance.
    xb = x.astype(jnp.bfloat16)
    w1b = params["w1"].astype(jnp.bfloat16)
    w2b = params["w2"].astype(jnp.bfloat16)
    h = jnp.maximum(
        jnp.dot(xb, w1b, preferred_element_type=jnp.float32) + params["b1"], 0.0)
    h = jnp.maximum(
        jnp.dot(h.astype(jnp.bfloat16), w2b,
                preferred_element_type=jnp.float32) + params["b2"], 0.0)
    logits = h @ params["w3"] + params["b3"]
    ref_bf16 = jax.nn.sigmoid(logits)
    assert jnp.allclose(out, ref_bf16, atol=1e-4), "mismatch vs bf16-matched ref"

    # Reference 2: pure float32 module semantics — loose tolerance covers the
    # bf16 matmul-input quantization (sigmoid output is bounded in [0, 1]).
    hf = jnp.maximum(x @ params["w1"] + params["b1"], 0.0)
    hf = jnp.maximum(hf @ params["w2"] + params["b2"], 0.0)
    ref_f32 = jax.nn.sigmoid(hf @ params["w3"] + params["b3"])
    assert jnp.allclose(out, ref_f32, atol=5e-2), "mismatch vs f32 ref"

    print("KERNEL_OK")
</pallas_src>

<mosaic_0001>
module attributes {stable_mosaic.version = 11 : i64} {
  func.func @_mlp_kernel(%arg0: i32, %arg1: memref<128x20xf32, #tpu.memory_space<vmem>>, %arg2: memref<20x64xbf16, #tpu.memory_space<vmem>>, %arg3: memref<1x64xf32, #tpu.memory_space<vmem>>, %arg4: memref<64x64xbf16, #tpu.memory_space<vmem>>, %arg5: memref<1x64xf32, #tpu.memory_space<vmem>>, %arg6: memref<1x64xf32, #tpu.memory_space<vmem>>, %arg7: memref<1x1xf32, #tpu.memory_space<vmem>>, %arg8: memref<1x128xf32, #tpu.memory_space<vmem>>) attributes {dimension_semantics = [#tpu.dimension_semantics<parallel>], iteration_bounds = array<i64: 1>, scalar_prefetch = 0 : i64, scratch_operands = 0 : i64, tpu.core_type = #tpu.core_type<tc>, window_params = [{transform_indices = @transform_0, window_bounds = array<i64: 128, 20>}, {pipeline_mode = #tpu.pipeline_mode<synchronous>, transform_indices = @transform_1, window_bounds = array<i64: 20, 64>}, {pipeline_mode = #tpu.pipeline_mode<synchronous>, transform_indices = @transform_2, window_bounds = array<i64: 1, 64>}, {pipeline_mode = #tpu.pipeline_mode<synchronous>, transform_indices = @transform_3, window_bounds = array<i64: 64, 64>}, {pipeline_mode = #tpu.pipeline_mode<synchronous>, transform_indices = @transform_4, window_bounds = array<i64: 1, 64>}, {pipeline_mode = #tpu.pipeline_mode<synchronous>, transform_indices = @transform_5, window_bounds = array<i64: 1, 64>}, {pipeline_mode = #tpu.pipeline_mode<synchronous>, transform_indices = @transform_6, window_bounds = array<i64: 1, 1>}, {transform_indices = @transform_7, window_bounds = array<i64: 1, 128>}]} {
    %c0 = arith.constant 0 : index
    %c0_0 = arith.constant 0 : index
    %0 = vector.load %arg1[%c0, %c0_0] : memref<128x20xf32, #tpu.memory_space<vmem>>, vector<128x20xf32>
    %1 = arith.truncf %0 : vector<128x20xf32> to vector<128x20xbf16>
    %c0_1 = arith.constant 0 : index
    %c0_2 = arith.constant 0 : index
    %2 = vector.load %arg2[%c0_1, %c0_2] : memref<20x64xbf16, #tpu.memory_space<vmem>>, vector<20x64xbf16>
    %cst = arith.constant dense<0.000000e+00> : vector<128x64xf32>
    %3 = tpu.matmul %1, %2, %cst {dimension_numbers = #tpu.dot_dimension_numbers<[1], [0], [0], [1], [0, 0, 1, 1], [], []>} : vector<128x20xbf16>, vector<20x64xbf16>, vector<128x64xf32> -> vector<128x64xf32>
    %c0_3 = arith.constant 0 : index
    %c0_4 = arith.constant 0 : index
    %4 = vector.load %arg3[%c0_3, %c0_4] : memref<1x64xf32, #tpu.memory_space<vmem>>, vector<1x64xf32>
    %5 = vector.broadcast %4 : vector<1x64xf32> to vector<128x64xf32>
    %6 = arith.addf %3, %5 : vector<128x64xf32>
    %cst_5 = arith.constant 0.000000e+00 : f32
    %7 = vector.broadcast %cst_5 : f32 to vector<128x64xf32>
    %8 = arith.maximumf %6, %7 : vector<128x64xf32>
    %9 = arith.truncf %8 : vector<128x64xf32> to vector<128x64xbf16>
    %c0_6 = arith.constant 0 : index
    %c0_7 = arith.constant 0 : index
    %10 = vector.load %arg4[%c0_6, %c0_7] : memref<64x64xbf16, #tpu.memory_space<vmem>>, vector<64x64xbf16>
    %cst_8 = arith.constant dense<0.000000e+00> : vector<128x64xf32>
    %11 = tpu.matmul %9, %10, %cst_8 {dimension_numbers = #tpu.dot_dimension_numbers<[1], [0], [0], [1], [0, 0, 1, 1], [], []>} : vector<128x64xbf16>, vector<64x64xbf16>, vector<128x64xf32> -> vector<128x64xf32>
    %c0_9 = arith.constant 0 : index
    %c0_10 = arith.constant 0 : index
    %12 = vector.load %arg5[%c0_9, %c0_10] : memref<1x64xf32, #tpu.memory_space<vmem>>, vector<1x64xf32>
    %13 = vector.broadcast %12 : vector<1x64xf32> to vector<128x64xf32>
    %14 = arith.addf %11, %13 : vector<128x64xf32>
    %cst_11 = arith.constant 0.000000e+00 : f32
    %15 = vector.broadcast %cst_11 : f32 to vector<128x64xf32>
    %16 = arith.maximumf %14, %15 : vector<128x64xf32>
    %c0_12 = arith.constant 0 : index
    %c0_13 = arith.constant 0 : index
    %17 = vector.load %arg6[%c0_12, %c0_13] : memref<1x64xf32, #tpu.memory_space<vmem>>, vector<1x64xf32>
    %cst_14 = arith.constant dense<0.000000e+00> : vector<1x128xf32>
    %18 = tpu.matmul %17, %16, %cst_14 {dimension_numbers = #tpu.dot_dimension_numbers<[1], [1], [0], [0], [0, 0, 1, 0], [], []>} : vector<1x64xf32>, vector<128x64xf32>, vector<1x128xf32> -> vector<1x128xf32>
    %c0_15 = arith.constant 0 : index
    %c0_16 = arith.constant 0 : index
    %19 = vector.load %arg7[%c0_15, %c0_16] : memref<1x1xf32, #tpu.memory_space<vmem>>, vector<1x1xf32>
    %20 = vector.broadcast %19 : vector<1x1xf32> to vector<1x128xf32>
    %21 = arith.addf %18, %20 : vector<1x128xf32>
    %cst_17 = arith.constant 5.000000e-01 : f32
    %22 = vector.broadcast %cst_17 : f32 to vector<1x128xf32>
    %23 = arith.mulf %22, %21 : vector<1x128xf32>
    %24 = math.tanh %23 : vector<1x128xf32>
    %cst_18 = arith.constant 1.000000e+00 : f32
    %25 = vector.broadcast %cst_18 : f32 to vector<1x128xf32>
    %26 = arith.addf %24, %25 : vector<1x128xf32>
    %cst_19 = arith.constant 5.000000e-01 : f32
    %27 = vector.broadcast %cst_19 : f32 to vector<1x128xf32>
    %28 = arith.mulf %27, %26 : vector<1x128xf32>
    %c0_20 = arith.constant 0 : index
    %c0_21 = arith.constant 0 : index
    %29 = vector.load %arg8[%c0_20, %c0_21] : memref<1x128xf32, #tpu.memory_space<vmem>>, vector<1x128xf32>
    tpu.vector_store %arg8[%c0_20, %c0_21], %28 {strides = array<i32>} : memref<1x128xf32, #tpu.memory_space<vmem>>, vector<1x128xf32>,
    return
  }
  func.func @transform_0(%arg0: i32) -> (i32, i32) {
    %c0_i32 = arith.constant 0 : i32
    %c0_i32_0 = arith.constant 0 : i32
    return %arg0, %c0_i32 : i32, i32
  }
  func.func @transform_1(%arg0: i32) -> (i32, i32) {
    %c0_i32 = arith.constant 0 : i32
    %c0_i32_0 = arith.constant 0 : i32
    %c0_i32_1 = arith.constant 0 : i32
    return %c0_i32, %c0_i32_0 : i32, i32
  }
  func.func @transform_2(%arg0: i32) -> (i32, i32) {
    %c0_i32 = arith.constant 0 : i32
    %c0_i32_0 = arith.constant 0 : i32
    %c0_i32_1 = arith.constant 0 : i32
    return %c0_i32, %c0_i32_0 : i32, i32
  }
  func.func @transform_3(%arg0: i32) -> (i32, i32) {
    %c0_i32 = arith.constant 0 : i32
    %c0_i32_0 = arith.constant 0 : i32
    %c0_i32_1 = arith.constant 0 : i32
    return %c0_i32, %c0_i32_0 : i32, i32
  }
  func.func @transform_4(%arg0: i32) -> (i32, i32) {
    %c0_i32 = arith.constant 0 : i32
    %c0_i32_0 = arith.constant 0 : i32
    %c0_i32_1 = arith.constant 0 : i32
    return %c0_i32, %c0_i32_0 : i32, i32
  }
  func.func @transform_5(%arg0: i32) -> (i32, i32) {
    %c0_i32 = arith.constant 0 : i32
    %c0_i32_0 = arith.constant 0 : i32
    %c0_i32_1 = arith.constant 0 : i32
    return %c0_i32, %c0_i32_0 : i32, i32
  }
  func.func @transform_6(%arg0: i32) -> (i32, i32) {
    %c0_i32 = arith.constant 0 : i32
    %c0_i32_0 = arith.constant 0 : i32
    %c0_i32_1 = arith.constant 0 : i32
    return %c0_i32, %c0_i32_0 : i32, i32
  }
  func.func @transform_7(%arg0: i32) -> (i32, i32) {
    %c0_i32 = arith.constant 0 : i32
    %c0_i32_0 = arith.constant 0 : i32
    return %c0_i32, %arg0 : i32, i32
  }
}

</mosaic_0001>

<llo_original>
// kernel: tpu_custom_call.1
$region0: #{tpu_custom_call.1}
  #allocation0 [shape = 'u32[]', space=smem, size = 0x4, offset = 0x4, fixed_abs, tag = 'smem constant byte address 0x4 - core index']
  #allocation1 [shape = 'u32[144,128]{1,0:T(1,128)}', space=vmem, size = 0x12000, scoped, tag = 'internal scratch']
  #allocation2 [shape = 'f32[1,1]{1,0:T(1,128)S(1)}', space=vmem, size = 0x200, scoped, tag = 'scoped memory for tpu_custom_call.1']
  %s0 = inlined_call_operand.hbm [shape: f32[8,20], index: 0, kind: input, shape index: {}]
  %s1 = inlined_call_operand.hbm [shape: bf16[20,64], index: 1, kind: input, shape index: {}]
  %s2 = inlined_call_operand.vmem [shape: f32[1,64], index: 2, kind: input, shape index: {}]
  %s3 = inlined_call_operand.hbm [shape: bf16[64,64], index: 3, kind: input, shape index: {}]
  %s4 = inlined_call_operand.vmem [shape: f32[1,64], index: 4, kind: input, shape index: {}]
  %s5 = inlined_call_operand.vmem [shape: f32[1,64], index: 5, kind: input, shape index: {}]
  %s6 = inlined_call_operand.<no memory space> [shape: f32[1,1], index: 6, kind: input, shape index: {}]
  %s7 = inlined_call_operand.hbm [shape: f32[1,128], index: 7, kind: output, shape index: {}]
  %s8 = sld [smem:[#allocation0]]
  $region50: #{tpu_custom_call.1} parent=0
    _
  %s10 = ssub.s32 1, %s8
  %s11 = scalar_select 0, %s10, %s8
  %v12 = vstv %s6
  %13 = vst [vmem:[#allocation2] sm:$0x1] %v12
  $region1: #{tpu_custom_call.1} parent=0
    #allocation3 [shape = 'u8[65536]{0}', space=vmem, size = 0x10000, scoped, tag = 'input window, operand 0, single buffered']
    #allocation4 [shape = 's32[1]{0}', space=sflag, size = 0x4, scoped, tag = 'scoped memory for tpu_custom_call.1']
    #allocation5 [shape = 's32[1]{0}', space=sflag, size = 0x4, scoped, tag = 'scoped memory for tpu_custom_call.1']
    #allocation6 [shape = 'u8[6144]{0}', space=vmem, size = 0x1800, scoped, tag = 'input window, operand 1, single buffered']
    #allocation7 [shape = 's32[1]{0}', space=sflag, size = 0x4, scoped, tag = 'scoped memory for tpu_custom_call.1']
    #allocation8 [shape = 'u8[16384]{0}', space=vmem, size = 0x4000, scoped, tag = 'input window, operand 3, single buffered']
    #allocation9 [shape = 'u8[512]{0}', space=vmem, size = 0x400, scoped, tag = 'output window, operand 0, single buffered']
    %14 = vsyncpa [#allocation4], 0
    %15 = vsyncpa [#allocation7], 0
    %16 = vsyncpa [#allocation5], 0
    // Predicated region
    $region2: #{tpu_custom_call.1} parent=1 // pred_check
      _
    $region3: #{tpu_custom_call.1} parent=1 // pred_check_branch
      %18 = sbr.rel (0) target = $region5
    $region4: #{tpu_custom_call.1} parent=1 // pred_region
      %s20 = ssub.s32 2048, 128
      %21 = vsyncadd [#allocation4], %s20
      %s22 = sshll.u32 [#allocation3], 4
      %s23 = int_to_ptr.vmem [resolvable:$true] %s22
      %28 = dma.hbm_to_vmem [thread:$0]  %s0, 128, %s23, [#allocation4], 128, 128, 8
    $region5: #{tpu_custom_call.1} parent=1 // pred_fallthru
      _
    // Predicated region
    $region6: #{tpu_custom_call.1} parent=1 // pred_check
      _
    $region7: #{tpu_custom_call.1} parent=1 // pred_check_branch
      %30 = sbr.rel (0) target = $region9
    $region8: #{tpu_custom_call.1} parent=1 // pred_region
      %s32 = ssub.s32 192, 192
      %33 = vsyncadd [#allocation7], %s32
      %s34 = sshll.u32 [#allocation6], 4
      %s35 = int_to_ptr.vmem [resolvable:$true] %s34
      %40 = dma.hbm_to_vmem [thread:$0]  %s1, 192, %s35, [#allocation7], 64, 64, 4
    $region9: #{tpu_custom_call.1} parent=1 // pred_fallthru
      _
    // Predicated region
    $region10: #{tpu_custom_call.1} parent=1 // pred_check
      _
    $region11: #{tpu_custom_call.1} parent=1 // pred_check_branch
      %42 = sbr.rel (0) target = $region13
    $region12: #{tpu_custom_call.1} parent=1 // pred_region
      _
    $region13: #{tpu_custom_call.1} parent=1 // pred_fallthru
      _
    // Predicated region
    $region14: #{tpu_custom_call.1} parent=1 // pred_check
      _
    $region15: #{tpu_custom_call.1} parent=1 // pred_check_branch
      %44 = sbr.rel (0) target = $region17
    $region16: #{tpu_custom_call.1} parent=1 // pred_region
      %s46 = ssub.s32 512, 512
      %47 = vsyncadd [#allocation7], %s46
      %s48 = sshll.u32 [#allocation8], 4
      %s49 = int_to_ptr.vmem [resolvable:$true] %s48
      %54 = dma.hbm_to_vmem [thread:$0]  %s3, 512, %s49, [#allocation7], 64, 64, 4
    $region17: #{tpu_custom_call.1} parent=1 // pred_fallthru
      _
    // Predicated region
    $region18: #{tpu_custom_call.1} parent=1 // pred_check
      _
    $region19: #{tpu_custom_call.1} parent=1 // pred_check_branch
      %56 = sbr.rel (0) target = $region21
    $region20: #{tpu_custom_call.1} parent=1 // pred_region
      _
    $region21: #{tpu_custom_call.1} parent=1 // pred_fallthru
      _
    // Predicated region
    $region22: #{tpu_custom_call.1} parent=1 // pred_check
      _
    $region23: #{tpu_custom_call.1} parent=1 // pred_check_branch
      %58 = sbr.rel (0) target = $region25
    $region24: #{tpu_custom_call.1} parent=1 // pred_region
      _
    $region25: #{tpu_custom_call.1} parent=1 // pred_fallthru
      _
    // Predicated region
    $region26: #{tpu_custom_call.1} parent=1 // pred_check
      _
    $region27: #{tpu_custom_call.1} parent=1 // pred_check_branch
      %60 = sbr.rel (0) target = $region29
    $region28: #{tpu_custom_call.1} parent=1 // pred_region
      _
    $region29: #{tpu_custom_call.1} parent=1 // pred_fallthru
      _
    // Predicated region
    $region30: #{tpu_custom_call.1} parent=1 // pred_check
      _
    $region31: #{tpu_custom_call.1} parent=1 // pred_check_branch
      %62 = sbr.rel (0) target = $region33
    $region32: #{tpu_custom_call.1} parent=1 // pred_region
      %63 = dma.done [#allocation4], 2048
    $region33: #{tpu_custom_call.1} parent=1 // pred_fallthru
      _
    // Predicated region
    $region34: #{tpu_custom_call.1} parent=1 // pred_check
      _
    $region35: #{tpu_custom_call.1} parent=1 // pred_check_branch
      %65 = sbr.rel (0) target = $region37
    $region36: #{tpu_custom_call.1} parent=1 // pred_region
      %66 = dma.done [#allocation7], 192
    $region37: #{tpu_custom_call.1} parent=1 // pred_fallthru
      _
    // Predicated region
    $region38: #{tpu_custom_call.1} parent=1 // pred_check
      _
    $region39: #{tpu_custom_call.1} parent=1 // pred_check_branch
      %68 = sbr.rel (0) target = $region41
    $region40: #{tpu_custom_call.1} parent=1 // pred_region
      %69 = dma.done [#allocation7], 512
    $region41: #{tpu_custom_call.1} parent=1 // pred_fallthru
      _
    %v71 = vld [vmem:[#allocation3] sm:$0xff]
    %v72 = vld [vmem:[#allocation3 + $0x8] sm:$0xff]
    %v73 = vld [vmem:[#allocation3 + $0x10] sm:$0xff]
    %v74 = vld [vmem:[#allocation3 + $0x18] sm:$0xff]
    %v75 = vld [vmem:[#allocation3 + $0x20] sm:$0xff]
    %v76 = vld [vmem:[#allocation3 + $0x28] sm:$0xff]
    %v77 = vld [vmem:[#allocation3 + $0x30] sm:$0xff]
    %v78 = vld [vmem:[#allocation3 + $0x38] sm:$0xff]
    %v79 = vld [vmem:[#allocation3 + $0x40] sm:$0xff]
    %v80 = vld [vmem:[#allocation3 + $0x48] sm:$0xff]
    %v81 = vld [vmem:[#allocation3 + $0x50] sm:$0xff]
    %v82 = vld [vmem:[#allocation3 + $0x58] sm:$0xff]
    %v83 = vld [vmem:[#allocation3 + $0x60] sm:$0xff]
    %v84 = vld [vmem:[#allocation3 + $0x68] sm:$0xff]
    %v85 = vld [vmem:[#allocation3 + $0x70] sm:$0xff]
    %v86 = vld [vmem:[#allocation3 + $0x78] sm:$0xff]
    %v87 = vpack.c.bf16 %v72, %v71
    %v88 = vpack.c.bf16 %v74, %v73
    %v89 = vpack.c.bf16 %v76, %v75
    %v90 = vpack.c.bf16 %v78, %v77
    %v91 = vpack.c.bf16 %v80, %v79
    %v92 = vpack.c.bf16 %v82, %v81
    %v93 = vpack.c.bf16 %v84, %v83
    %v94 = vpack.c.bf16 %v86, %v85
    %v95 = vld [vmem:[#allocation6] sm:$0xf]
    %v96 = vld [vmem:[#allocation6 + $0x4] sm:$0xf]
    %v97 = vld [vmem:[#allocation6 + $0x8] sm:$0x3]
    %v98 = vld [vmem:[%s2] sm:$0x1]
    %v100 = vlaneseq
    %v101 = vshrl.u32 %v100, 7
    %v102 = vsub.s32 0, %v101
    %v103 = vrot.slane %v98, %v102
    %v108 = vunpack.c.l.b16 %v95
    %v109 = vunpack.c.l.b16 %v96
    %v110 = vunpack.c.l.b16 %v97
    %v111 = vpack.c.b16 %v109, %v108
    %v112 = vpack.c.b16 %v110, %v110
    %vm114 = vcmask 162816
    %v116 = vsel %vm114, %v87, 0
    %v119 = vsel %vm114, %v88, 0
    %v122 = vsel %vm114, %v89, 0
    %v125 = vsel %vm114, %v90, 0
    %v128 = vsel %vm114, %v91, 0
    %v131 = vsel %vm114, %v92, 0
    %v134 = vsel %vm114, %v93, 0
    %v137 = vsel %vm114, %v94, 0
    %vm139 = vcmask 1041408
    %v141 = vsel %vm139, %v112, 0
    %143 = vmatprep.subr.bf16.mxu0 0
    %144 = vmatpush1.bf16.msra.mxu0 0
    %145 = vmatprep.subr.bf16.mxu0 0
    %146 = vmatpush1.bf16.msra.mxu0 0
    %147 = vmatprep.subr.bf16.mxu0 0
    %148 = vmatpush1.bf16.msra.mxu0 0
    %149 = vmatprep.subr.bf16.mxu0 0
    %150 = vmatpush1.bf16.msra.mxu0 0
    %151 = vmatprep.subr.bf16.mxu0 0
    %152 = vmatpush1.bf16.msra.mxu0 0
    %153 = vmatprep.subr.bf16.mxu0 0
    %154 = vmatpush1.bf16.msra.mxu0 0
    %155 = vmatprep.subr.bf16.mxu0 0
    %156 = vmatpush1.bf16.msra.mxu0 %v141
    %157 = vmatprep.subr.bf16.mxu0 0
    %158 = vmatpush1.bf16.msra.mxu0 %v111
    %159 = vmatprep.subr.bf16.mxu0 0
    %160 = vmatpush2.bf16.msra.mxu0 0
    %161 = vmatprep.subr.bf16.mxu0 0
    %162 = vmatpush2.bf16.msra.mxu0 0
    %163 = vmatprep.subr.bf16.mxu0 0
    %164 = vmatpush2.bf16.msra.mxu0 0
    %165 = vmatprep.subr.bf16.mxu0 0
    %166 = vmatpush2.bf16.msra.mxu0 0
    %167 = vmatprep.subr.bf16.mxu0 0
    %168 = vmatpush2.bf16.msra.mxu0 0
    %169 = vmatprep.subr.bf16.mxu0 0
    %170 = vmatpush2.bf16.msra.mxu0 0
    %171 = vmatprep.subr.bf16.mxu0 0
    %172 = vmatpush2.bf16.msra.mxu0 0
    %173 = vmatprep.subr.bf16.mxu0 0
    %174 = vmatpush2.bf16.msra.mxu0 0
    %175 = vmatprep.mubr.bf16.mxu0 0
    %176 = vmatmul.mubr.bf16.gmra.mxu0 %v116
    %v177 = vpop.f32.mrf.mxu0
    %v178 = vadd.f32 %v103, %v177
    %v179 = vpop.f32.mrf.mxu0
    %v180 = vpop.f32.mrf.mxu0
    %v181 = vadd.f32 %v103, %v180
    %v182 = vpop.f32.mrf.mxu0
    %183 = vmatprep.mubr.bf16.mxu0 0
    %184 = vmatmul.mubr.bf16.gmra.mxu0 %v119
    %v185 = vpop.f32.mrf.mxu0
    %v186 = vadd.f32 %v103, %v185
    %v187 = vpop.f32.mrf.mxu0
    %v188 = vpop.f32.mrf.mxu0
    %v189 = vadd.f32 %v103, %v188
    %v190 = vpop.f32.mrf.mxu0
    %191 = vmatprep.mubr.bf16.mxu0 0
    %192 = vmatmul.mubr.bf16.gmra.mxu0 %v122
    %v193 = vpop.f32.mrf.mxu0
    %v194 = vadd.f32 %v103, %v193
    %v195 = vpop.f32.mrf.mxu0
    %v196 = vpop.f32.mrf.mxu0
    %v197 = vadd.f32 %v103, %v196
    %v198 = vpop.f32.mrf.mxu0
    %199 = vmatprep.mubr.bf16.mxu0 0
    %200 = vmatmul.mubr.bf16.gmra.mxu0 %v125
    %v201 = vpop.f32.mrf.mxu0
    %v202 = vadd.f32 %v103, %v201
    %v203 = vpop.f32.mrf.mxu0
    %v204 = vpop.f32.mrf.mxu0
    %v205 = vadd.f32 %v103, %v204
    %v206 = vpop.f32.mrf.mxu0
    %207 = vmatprep.mubr.bf16.mxu0 0
    %208 = vmatmul.mubr.bf16.gmra.mxu0 %v128
    %v209 = vpop.f32.mrf.mxu0
    %v210 = vadd.f32 %v103, %v209
    %v211 = vpop.f32.mrf.mxu0
    %v212 = vpop.f32.mrf.mxu0
    %v213 = vadd.f32 %v103, %v212
    %v214 = vpop.f32.mrf.mxu0
    %215 = vmatprep.mubr.bf16.mxu0 0
    %216 = vmatmul.mubr.bf16.gmra.mxu0 %v131
    %v217 = vpop.f32.mrf.mxu0
    %v218 = vadd.f32 %v103, %v217
    %v219 = vpop.f32.mrf.mxu0
    %v220 = vpop.f32.mrf.mxu0
    %v221 = vadd.f32 %v103, %v220
    %v222 = vpop.f32.mrf.mxu0
    %223 = vmatprep.mubr.bf16.mxu0 0
    %224 = vmatmul.mubr.bf16.gmra.mxu0 %v134
    %v225 = vpop.f32.mrf.mxu0
    %v226 = vadd.f32 %v103, %v225
    %v227 = vpop.f32.mrf.mxu0
    %v228 = vpop.f32.mrf.mxu0
    %v229 = vadd.f32 %v103, %v228
    %v230 = vpop.f32.mrf.mxu0
    %231 = vmatprep.mubr.bf16.mxu0 0
    %232 = vmatmul.mubr.bf16.gmra.mxu0 %v137
    %v233 = vpop.f32.mrf.mxu0
    %v234 = vadd.f32 %v103, %v233
    %v235 = vpop.f32.mrf.mxu0
    %v236 = vpop.f32.mrf.mxu0
    %v237 = vadd.f32 %v103, %v236
    %v238 = vpop.f32.mrf.mxu0
    %239 = vdwg.mxu0
    %v240 = vmax.f32 %v178, 0.0
    %v241 = vmax.f32 %v181, 0.0
    %v242 = vmax.f32 %v186, 0.0
    %v243 = vmax.f32 %v189, 0.0
    %v244 = vmax.f32 %v194, 0.0
    %v245 = vmax.f32 %v197, 0.0
    %v246 = vmax.f32 %v202, 0.0
    %v247 = vmax.f32 %v205, 0.0
    %v248 = vmax.f32 %v210, 0.0
    %v249 = vmax.f32 %v213, 0.0
    %v250 = vmax.f32 %v218, 0.0
    %v251 = vmax.f32 %v221, 0.0
    %v252 = vmax.f32 %v226, 0.0
    %v253 = vmax.f32 %v229, 0.0
    %v254 = vmax.f32 %v234, 0.0
    %v255 = vmax.f32 %v237, 0.0
    %v256 = vpack.c.bf16 %v241, %v240
    %v257 = vpack.c.bf16 %v243, %v242
    %v258 = vpack.c.bf16 %v245, %v244
    %v259 = vpack.c.bf16 %v247, %v246
    %v260 = vpack.c.bf16 %v249, %v248
    %v261 = vpack.c.bf16 %v251, %v250
    %v262 = vpack.c.bf16 %v253, %v252
    %v263 = vpack.c.bf16 %v255, %v254
    %v264 = vld [vmem:[#allocation8] sm:$0xf]
    %v265 = vld [vmem:[#allocation8 + $0x4] sm:$0xf]
    %v266 = vld [vmem:[#allocation8 + $0x8] sm:$0xf]
    %v267 = vld [vmem:[#allocation8 + $0xc] sm:$0xf]
    %v268 = vld [vmem:[#allocation8 + $0x10] sm:$0xf]
    %v269 = vld [vmem:[#allocation8 + $0x14] sm:$0xf]
    %v270 = vld [vmem:[#allocation8 + $0x18] sm:$0xf]
    %v271 = vld [vmem:[#allocation8 + $0x1c] sm:$0xf]
    %v272 = vld [vmem:[%s4] sm:$0x1]
    %v274 = vlaneseq
    %v275 = vshrl.u32 %v274, 7
    %v276 = vsub.s32 0, %v275
    %v277 = vrot.slane %v272, %v276
    %v287 = vunpack.c.l.b16 %v264
    %v288 = vunpack.c.l.b16 %v265
    %v289 = vunpack.c.l.b16 %v266
    %v290 = vunpack.c.l.b16 %v267
    %v291 = vunpack.c.l.b16 %v268
    %v292 = vunpack.c.l.b16 %v269
    %v293 = vunpack.c.l.b16 %v270
    %v294 = vunpack.c.l.b16 %v271
    %v295 = vpack.c.b16 %v288, %v287
    %v296 = vpack.c.b16 %v290, %v289
    %v297 = vpack.c.b16 %v292, %v291
    %v298 = vpack.c.b16 %v294, %v293
    %vm303 = vcmask 523264
    %v305 = vsel %vm303, %v256, 0
    %v308 = vsel %vm303, %v257, 0
    %v311 = vsel %vm303, %v258, 0
    %v314 = vsel %vm303, %v259, 0
    %v317 = vsel %vm303, %v260, 0
    %v320 = vsel %vm303, %v261, 0
    %v323 = vsel %vm303, %v262, 0
    %v326 = vsel %vm303, %v263, 0
    %328 = vmatprep.subr.bf16.mxu0 0
    %329 = vmatpush1.bf16.msra.mxu0 0
    %330 = vmatprep.subr.bf16.mxu0 0
    %331 = vmatpush1.bf16.msra.mxu0 0
    %332 = vmatprep.subr.bf16.mxu0 0
    %333 = vmatpush1.bf16.msra.mxu0 0
    %334 = vmatprep.subr.bf16.mxu0 0
    %335 = vmatpush1.bf16.msra.mxu0 0
    %336 = vmatprep.subr.bf16.mxu0 0
    %337 = vmatpush1.bf16.msra.mxu0 %v298
    %338 = vmatprep.subr.bf16.mxu0 0
    %339 = vmatpush1.bf16.msra.mxu0 %v297
    %340 = vmatprep.subr.bf16.mxu0 0
    %341 = vmatpush1.bf16.msra.mxu0 %v296
    %342 = vmatprep.subr.bf16.mxu0 0
    %343 = vmatpush1.bf16.msra.mxu0 %v295
    %344 = vmatprep.subr.bf16.mxu0 0
    %345 = vmatpush2.bf16.msra.mxu0 0
    %346 = vmatprep.subr.bf16.mxu0 0
    %347 = vmatpush2.bf16.msra.mxu0 0
    %348 = vmatprep.subr.bf16.mxu0 0
    %349 = vmatpush2.bf16.msra.mxu0 0
    %350 = vmatprep.subr.bf16.mxu0 0
    %351 = vmatpush2.bf16.msra.mxu0 0
    %352 = vmatprep.subr.bf16.mxu0 0
    %353 = vmatpush2.bf16.msra.mxu0 0
    %354 = vmatprep.subr.bf16.mxu0 0
    %355 = vmatpush2.bf16.msra.mxu0 0
    %356 = vmatprep.subr.bf16.mxu0 0
    %357 = vmatpush2.bf16.msra.mxu0 0
    %358 = vmatprep.subr.bf16.mxu0 0
    %359 = vmatpush2.bf16.msra.mxu0 0
    %360 = vmatprep.mubr.bf16.mxu0 0
    %361 = vmatmul.mubr.bf16.gmra.mxu0 %v305
    %v362 = vpop.f32.mrf.mxu0
    %v363 = vadd.f32 %v277, %v362
    %v364 = vpop.f32.mrf.mxu0
    %v365 = vpop.f32.mrf.mxu0
    %v366 = vadd.f32 %v277, %v365
    %v367 = vpop.f32.mrf.mxu0
    %368 = vmatprep.mubr.bf16.mxu0 0
    %369 = vmatmul.mubr.bf16.gmra.mxu0 %v308
    %v370 = vpop.f32.mrf.mxu0
    %v371 = vadd.f32 %v277, %v370
    %v372 = vpop.f32.mrf.mxu0
    %v373 = vpop.f32.mrf.mxu0
    %v374 = vadd.f32 %v277, %v373
    %v375 = vpop.f32.mrf.mxu0
    %376 = vmatprep.mubr.bf16.mxu0 0
    %377 = vmatmul.mubr.bf16.gmra.mxu0 %v311
    %v378 = vpop.f32.mrf.mxu0
    %v379 = vadd.f32 %v277, %v378
    %v380 = vpop.f32.mrf.mxu0
    %v381 = vpop.f32.mrf.mxu0
    %v382 = vadd.f32 %v277, %v381
    %v383 = vpop.f32.mrf.mxu0
    %384 = vmatprep.mubr.bf16.mxu0 0
    %385 = vmatmul.mubr.bf16.gmra.mxu0 %v314
    %v386 = vpop.f32.mrf.mxu0
    %v387 = vadd.f32 %v277, %v386
    %v388 = vpop.f32.mrf.mxu0
    %v389 = vpop.f32.mrf.mxu0
    %v390 = vadd.f32 %v277, %v389
    %v391 = vpop.f32.mrf.mxu0
    %392 = vmatprep.mubr.bf16.mxu0 0
    %393 = vmatmul.mubr.bf16.gmra.mxu0 %v317
    %v394 = vpop.f32.mrf.mxu0
    %v395 = vadd.f32 %v277, %v394
    %v396 = vpop.f32.mrf.mxu0
    %v397 = vpop.f32.mrf.mxu0
    %v398 = vadd.f32 %v277, %v397
    %v399 = vpop.f32.mrf.mxu0
    %400 = vmatprep.mubr.bf16.mxu0 0
    %401 = vmatmul.mubr.bf16.gmra.mxu0 %v320
    %v402 = vpop.f32.mrf.mxu0
    %v403 = vadd.f32 %v277, %v402
    %v404 = vpop.f32.mrf.mxu0
    %v405 = vpop.f32.mrf.mxu0
    %v406 = vadd.f32 %v277, %v405
    %v407 = vpop.f32.mrf.mxu0
    %408 = vmatprep.mubr.bf16.mxu0 0
    %409 = vmatmul.mubr.bf16.gmra.mxu0 %v323
    %v410 = vpop.f32.mrf.mxu0
    %v411 = vadd.f32 %v277, %v410
    %v412 = vpop.f32.mrf.mxu0
    %v413 = vpop.f32.mrf.mxu0
    %v414 = vadd.f32 %v277, %v413
    %v415 = vpop.f32.mrf.mxu0
    %416 = vmatprep.mubr.bf16.mxu0 0
    %417 = vmatmul.mubr.bf16.gmra.mxu0 %v326
    %v418 = vpop.f32.mrf.mxu0
    %v419 = vadd.f32 %v277, %v418
    %v420 = vpop.f32.mrf.mxu0
    %v421 = vpop.f32.mrf.mxu0
    %v422 = vadd.f32 %v277, %v421
    %v423 = vpop.f32.mrf.mxu0
    %424 = vdwg.mxu0
    %v425 = vmax.f32 %v363, 0.0
    %v426 = vmax.f32 %v366, 0.0
    %v427 = vmax.f32 %v371, 0.0
    %v428 = vmax.f32 %v374, 0.0
    %v429 = vmax.f32 %v379, 0.0
    %v430 = vmax.f32 %v382, 0.0
    %v431 = vmax.f32 %v387, 0.0
    %v432 = vmax.f32 %v390, 0.0
    %v433 = vmax.f32 %v395, 0.0
    %v434 = vmax.f32 %v398, 0.0
    %v435 = vmax.f32 %v403, 0.0
    %v436 = vmax.f32 %v406, 0.0
    %v437 = vmax.f32 %v411, 0.0
    %v438 = vmax.f32 %v414, 0.0
    %v439 = vmax.f32 %v419, 0.0
    %v440 = vmax.f32 %v422, 0.0
    %v441 = vld [vmem:[%s5] sm:$0x1]
    %v442 = vld [vmem:[#allocation2] sm:$0x1]
    %444 = vset.pattern.permute.xlu0 0
    %445 = vperm.xlu0 %444, %v442
    %v446 = vpop.permute.xlu0 %445
    %v448 = vlaneseq
    %v449 = vshrl.u32 %v448, 7
    %v450 = vsub.s32 0, %v449
    %v451 = vrot.slane %v446, %v450
    %v453 = vsel %vm303, %v441, 0
    %v456 = vsel %vm303, %v425, 0
    %v459 = vsel %vm303, %v426, 0
    %v462 = vsel %vm303, %v427, 0
    %v465 = vsel %vm303, %v428, 0
    %v468 = vsel %vm303, %v429, 0
    %v471 = vsel %vm303, %v430, 0
    %v474 = vsel %vm303, %v431, 0
    %v477 = vsel %vm303, %v432, 0
    %v480 = vsel %vm303, %v433, 0
    %v483 = vsel %vm303, %v434, 0
    %v486 = vsel %vm303, %v435, 0
    %v489 = vsel %vm303, %v436, 0
    %v492 = vsel %vm303, %v437, 0
    %v495 = vsel %vm303, %v438, 0
    %v498 = vsel %vm303, %v439, 0
    %v501 = vsel %vm303, %v440, 0
    %503 = vmatprep.subr.mxu0 0.0
    %504 = vmatpush1.xpose.msra.mxu0 %v501
    %505 = vmatprep.subr.mxu0 0.0
    %506 = vmatpush1.xpose.msra.mxu0 %v498
    %507 = vmatprep.subr.mxu0 0.0
    %508 = vmatpush1.xpose.msra.mxu0 %v495
    %509 = vmatprep.subr.mxu0 0.0
    %510 = vmatpush1.xpose.msra.mxu0 %v492
    %511 = vmatprep.subr.mxu0 0.0
    %512 = vmatpush1.xpose.msra.mxu0 %v489
    %513 = vmatprep.subr.mxu0 0.0
    %514 = vmatpush1.xpose.msra.mxu0 %v486
    %515 = vmatprep.subr.mxu0 0.0
    %516 = vmatpush1.xpose.msra.mxu0 %v483
    %517 = vmatprep.subr.mxu0 0.0
    %518 = vmatpush1.xpose.msra.mxu0 %v480
    %519 = vmatprep.subr.mxu0 0.0
    %520 = vmatpush1.xpose.msra.mxu0 %v477
    %521 = vmatprep.subr.mxu0 0.0
    %522 = vmatpush1.xpose.msra.mxu0 %v474
    %523 = vmatprep.subr.mxu0 0.0
    %524 = vmatpush1.xpose.msra.mxu0 %v471
    %525 = vmatprep.subr.mxu0 0.0
    %526 = vmatpush1.xpose.msra.mxu0 %v468
    %527 = vmatprep.subr.mxu0 0.0
    %528 = vmatpush1.xpose.msra.mxu0 %v465
    %529 = vmatprep.subr.mxu0 0.0
    %530 = vmatpush1.xpose.msra.mxu0 %v462
    %531 = vmatprep.subr.mxu0 0.0
    %532 = vmatpush1.xpose.msra.mxu0 %v459
    %533 = vmatprep.subr.mxu0 0.0
    %534 = vmatpush1.xpose.msra.mxu0 %v456
    %535 = vmatprep.subr.mxu0 0.0
    %536 = vmatpush2.xpose.msra.mxu0 0.0
    %537 = vmatprep.subr.mxu0 0.0
    %538 = vmatpush2.xpose.msra.mxu0 0.0
    %539 = vmatprep.subr.mxu0 0.0
    %540 = vmatpush2.xpose.msra.mxu0 0.0
    %541 = vmatprep.subr.mxu0 0.0
    %542 = vmatpush2.xpose.msra.mxu0 0.0
    %543 = vmatprep.subr.mxu0 0.0
    %544 = vmatpush2.xpose.msra.mxu0 0.0
    %545 = vmatprep.subr.mxu0 0.0
    %546 = vmatpush2.xpose.msra.mxu0 0.0
    %547 = vmatprep.subr.mxu0 0.0
    %548 = vmatpush2.xpose.msra.mxu0 0.0
    %549 = vmatprep.subr.mxu0 0.0
    %550 = vmatpush2.xpose.msra.mxu0 0.0
    %551 = vmatprep.subr.mxu0 0.0
    %552 = vmatpush2.xpose.msra.mxu0 0.0
    %553 = vmatprep.subr.mxu0 0.0
    %554 = vmatpush2.xpose.msra.mxu0 0.0
    %555 = vmatprep.subr.mxu0 0.0
    %556 = vmatpush2.xpose.msra.mxu0 0.0
    %557 = vmatprep.subr.mxu0 0.0
    %558 = vmatpush2.xpose.msra.mxu0 0.0
    %559 = vmatprep.subr.mxu0 0.0
    %560 = vmatpush2.xpose.msra.mxu0 0.0
    %561 = vmatprep.subr.mxu0 0.0
    %562 = vmatpush2.xpose.msra.mxu0 0.0
    %563 = vmatprep.subr.mxu0 0.0
    %564 = vmatpush2.xpose.msra.mxu0 0.0
    %565 = vmatprep.subr.mxu0 0.0
    %566 = vmatpush2.xpose.msra.mxu0 0.0
    %567 = vmatprep.mubr.f32.mxu0 0.0
    %568 = vmatmul.mubr.f32.gmra.mxu0 %v453
    %v569 = vpop.f32.mrf.mxu0
    %v570 = vadd.f32 %v451, %v569
    %v571 = vpop.f32.mrf.mxu0
    %572 = vdwg.mxu0
    %v573 = vmul.f32 %v570, 0.5
    %v574 = vtanh.pop %v573
    %v575 = vadd.f32 %v574, 1.0
    %v576 = vmul.f32 %v575, 0.5
    %577 = vst [vmem:[#allocation9] sm:$0x1] %v576
    // Predicated region
    $region42: #{tpu_custom_call.1} parent=1 // pred_check
      _
    $region43: #{tpu_custom_call.1} parent=1 // pred_check_branch
      %579 = sbr.rel (0) target = $region45
    $region44: #{tpu_custom_call.1} parent=1 // pred_region
      %s581 = ssub.s32 16, 16
      %582 = vsyncadd [#allocation5], %s581
      %s584 = sshll.u32 [#allocation9], 4
      %s585 = int_to_ptr.vmem [resolvable:$true] %s584
      %587 = dma.vmem_to_hbm [thread:$0]  %s585, 16, %s7, [#allocation5]
    $region45: #{tpu_custom_call.1} parent=1 // pred_fallthru
      _
    // Predicated region
    $region46: #{tpu_custom_call.1} parent=1 // pred_check
      _
    $region47: #{tpu_custom_call.1} parent=1 // pred_check_branch
      %589 = sbr.rel (0) target = $region49
    $region48: #{tpu_custom_call.1} parent=1 // pred_region
      %590 = dma.done [#allocation5], 16
    $region49: #{tpu_custom_call.1} parent=1 // pred_fallthru
      _
    %591 = vsyncpa [#allocation4], 1
    %592 = vsyncpa [#allocation7], 1
    %593 = vsyncpa [#allocation5], 1

</llo_original>
